<compile_context>
chip_gen: v7x
topology: tpu7x:2x2x1
jax: 0.10.0
libtpu: 0.0.40
codegen_flags: <defaults>
</compile_context>

<pallas_src>
import jax
import jax.numpy as jnp
from jax.experimental import pallas as pl
from jax.experimental.pallas import tpu as pltpu


def _round_up(n, m):
    return (n + m - 1) // m * m


def _skip_connect_kernel(x_ref, w_ref, b_ref, o_ref):
    """Fused forward: 5 MXU matmuls + VPU relus / skip-adds in one kernel.

    x_ref: (tm, H)   f32 activations
    w_ref: (H, 7H)   bf16 packed weights [NOCHILD|HASCHILD|valence|LEFT|RIGHT|direction|lin1·lin2]
    b_ref: (1, 7H)   f32  packed biases  (same column layout; lin1·lin2 bias pre-fused)
    o_ref: (tm, 4H)  f32  lane-dense output, column block (d*2 + v)*H
    """
    tm, H = x_ref.shape
    x = x_ref[...]                                    # (tm, H) f32

    def mm(a_f32, col, width):
        # bf16 MXU matmul with f32 accumulation; bias added in f32 on the VPU.
        w = w_ref[:, col:col + width]                 # (H, width) bf16, lane-aligned
        b = b_ref[:, col:col + width]                 # (1, width) f32
        return jnp.dot(a_f32.astype(jnp.bfloat16), w,
                       preferred_element_type=jnp.float32) + b

    h0 = jnp.maximum(x, 0.0)

    # NOCHILD / HASCHILD fused along N: cols [0:H]=NOCHILD, [H:2H]=HASCHILD.
    nc_hc = mm(h0, 0, 2 * H)                          # (tm, 2H)
    no_child = nc_hc[:, :H] + x
    has_child = nc_hc[:, H:] + x

    # Valence: batch the two branches along M. Row block v: 0=no_child, 1=has_child.
    v_in = jnp.concatenate([no_child, has_child], axis=0)          # (2tm, H)
    hv = jnp.maximum(mm(jnp.maximum(v_in, 0.0), 2 * H, H), 0.0)    # (2tm, H)

    # LEFT / RIGHT fused along N: cols [3H:4H]=LEFT, [4H:5H]=RIGHT.
    lr = mm(hv, 3 * H, 2 * H)                         # (2tm, 2H)
    x2 = jnp.concatenate([x, x], axis=0)              # skip connection (expanded x)
    left_h = lr[:, :H] + x2
    right_h = lr[:, H:] + x2

    # Direction: batch the four (direction, valence) branches along M.
    # Row block order: (L,nc),(L,hc),(R,nc),(R,hc)  == d*2 + v.
    d_in = jnp.concatenate([left_h, right_h], axis=0)               # (4tm, H)
    hd = jnp.maximum(mm(jnp.maximum(d_in, 0.0), 5 * H, H), 0.0)     # (4tm, H)

    # Pre-fused linear1·linear2, then final relu.
    out = jnp.maximum(mm(hd, 6 * H, H), 0.0)          # (4tm, H)

    # Lane-dense stores: each slab is a full (tm, H) region at a 128-lane
    # aligned offset -> unmasked vst.
    for blk in range(4):                              # blk == d*2 + v
        o_ref[:, blk * H:(blk + 1) * H] = out[blk * tm:(blk + 1) * tm]


def skip_connect_encoder(x, params, *, tm=None):
    """x: (B, H) float32. params: dict of 8 (W, b) pairs (PyTorch layout W:(out,in))."""
    B, H = x.shape

    # Row tile: whole batch in one step when it fits; otherwise 256-row tiles.
    if tm is None:
        tm = min(_round_up(max(B, 1), 8), 256)
    else:
        tm = _round_up(max(tm, 8), 8)
    Bp = _round_up(B, tm)
    xp = x if Bp == B else jnp.pad(x, ((0, Bp - B), (0, 0)))

    def wt(name):   # (out, in) torch layout -> (in, out) so kernel does x @ W
        return jnp.asarray(params[name][0], jnp.float32).T

    def bias(name):
        return jnp.asarray(params[name][1], jnp.float32).reshape(1, H)

    # Pre-fuse linear1 @ linear2 (no nonlinearity between them in the module).
    w1t, w2t = wt("linear1"), wt("linear2")
    w12 = jnp.dot(w1t, w2t, precision=jax.lax.Precision.HIGHEST)
    b12 = jnp.dot(bias("linear1"), w2t, precision=jax.lax.Precision.HIGHEST) \
        + bias("linear2")

    # Pack everything into one weight matrix / one bias row (lane-concatenated).
    # Column layout: [NOCHILD | HASCHILD | valence | LEFT | RIGHT | direction | lin1·lin2]
    w_all = jnp.concatenate(
        [wt("NOCHILD"), wt("HASCHILD"), wt("valence"),
         wt("LEFT"), wt("RIGHT"), wt("direction"), w12],
        axis=1).astype(jnp.bfloat16)                                 # (H, 7H) bf16
    b_all = jnp.concatenate(
        [bias("NOCHILD"), bias("HASCHILD"), bias("valence"),
         bias("LEFT"), bias("RIGHT"), bias("direction"), b12],
        axis=1)                                                      # (1, 7H) f32

    out_flat = pl.pallas_call(
        _skip_connect_kernel,
        out_shape=jax.ShapeDtypeStruct((Bp, 4 * H), jnp.float32),
        grid_spec=pltpu.PrefetchScalarGridSpec(
            num_scalar_prefetch=0,
            grid=(Bp // tm,),
            in_specs=[
                pl.BlockSpec((tm, H), lambda i: (i, 0)),        # activations
                pl.BlockSpec((H, 7 * H), lambda i: (0, 0)),     # packed weights
                pl.BlockSpec((1, 7 * H), lambda i: (0, 0)),     # packed biases
            ],
            out_specs=pl.BlockSpec((tm, 4 * H), lambda i: (i, 0)),
        ),
        compiler_params=pltpu.CompilerParams(
            dimension_semantics=("parallel",)),
    )(xp, w_all, b_all)

    # (Bp, 4H) -> drop batch padding -> (B, direction=2, valence=2, H)
    return out_flat[:B].reshape(B, 2, 2, H)


def _reference(x, params):
    """Pure-JAX f32 reference mirroring the PyTorch forward exactly."""
    def lin(name, a):
        W, b = params[name]
        return a @ W.T + b

    h = jnp.maximum(x, 0.0)
    has_child = lin("HASCHILD", h) + x
    no_child = lin("NOCHILD", h) + x
    h = jnp.concatenate([no_child[..., None, :], has_child[..., None, :]], axis=-2)
    xe = jnp.broadcast_to(x[..., None, :], h.shape)
    h = jnp.maximum(lin("valence", jnp.maximum(h, 0.0)), 0.0)
    left_h = lin("LEFT", h) + xe
    right_h = lin("RIGHT", h) + xe
    h = jnp.concatenate([left_h[..., None, :, :], right_h[..., None, :, :]], axis=-3)
    h = jnp.maximum(lin("direction", jnp.maximum(h, 0.0)), 0.0)
    return jnp.maximum(lin("linear2", lin("linear1", h)), 0.0)


def _init_params(key, hidden):
    names = ["HASCHILD", "NOCHILD", "valence", "LEFT", "RIGHT",
             "direction", "linear1", "linear2"]
    params = {}
    for n in names:
        key, kw, kb = jax.random.split(key, 3)
        W = 0.1 * jax.random.normal(kw, (hidden, hidden), jnp.float32)  # (out, in)
        b = 0.1 * jax.random.normal(kb, (hidden,), jnp.float32)
        params[n] = (W, b)
    return params


if __name__ == "__main__":
    H = 128
    key = jax.random.PRNGKey(0)
    kx1, kx2, kp = jax.random.split(key, 3)
    params = _init_params(kp, H)

    # Case 1: ragged batch (exercises the padding path), single grid step.
    x1 = jax.random.normal(kx1, (13, H), jnp.float32)
    out1 = jax.block_until_ready(skip_connect_encoder(x1, params))
    ref1 = _reference(x1, params)
    assert out1.shape == (13, 2, 2, H), out1.shape
    # bf16 MXU inputs (f32 accumulation) over a chained-matmul network ->
    # looser tolerance than the pure-f32 reference.
    assert jnp.allclose(out1, ref1, atol=1e-1, rtol=5e-2), "mismatch (ragged batch)"

    # Case 2: multi-step grid (forced small row tile).
    x2 = jax.random.normal(kx2, (48, H), jnp.float32)
    out2 = jax.block_until_ready(skip_connect_encoder(x2, params, tm=16))
    ref2 = _reference(x2, params)
    assert out2.shape == (48, 2, 2, H), out2.shape
    assert jnp.allclose(out2, ref2, atol=1e-1, rtol=5e-2), "mismatch (multi-step grid)"

    print("KERNEL_OK")
</pallas_src>

<mosaic_0001>
module attributes {stable_mosaic.version = 11 : i64} {
  func.func @_skip_connect_kernel(%arg0: i32, %arg1: memref<16x128xf32, #tpu.memory_space<vmem>>, %arg2: memref<128x896xbf16, #tpu.memory_space<vmem>>, %arg3: memref<1x896xf32, #tpu.memory_space<vmem>>, %arg4: memref<16x512xf32, #tpu.memory_space<vmem>>) attributes {dimension_semantics = [#tpu.dimension_semantics<parallel>], iteration_bounds = array<i64: 1>, scalar_prefetch = 0 : i64, scratch_operands = 0 : i64, tpu.core_type = #tpu.core_type<tc>, window_params = [{transform_indices = @transform_0, window_bounds = array<i64: 16, 128>}, {pipeline_mode = #tpu.pipeline_mode<synchronous>, transform_indices = @transform_1, window_bounds = array<i64: 128, 896>}, {pipeline_mode = #tpu.pipeline_mode<synchronous>, transform_indices = @transform_2, window_bounds = array<i64: 1, 896>}, {transform_indices = @transform_3, window_bounds = array<i64: 16, 512>}]} {
    %c0 = arith.constant 0 : index
    %c0_0 = arith.constant 0 : index
    %0 = vector.load %arg1[%c0, %c0_0] : memref<16x128xf32, #tpu.memory_space<vmem>>, vector<16x128xf32>
    %cst = arith.constant 0.000000e+00 : f32
    %1 = vector.broadcast %cst : f32 to vector<16x128xf32>
    %2 = arith.maximumf %0, %1 : vector<16x128xf32>
    %c0_1 = arith.constant 0 : index
    %c0_2 = arith.constant 0 : index
    %3 = vector.load %arg2[%c0_1, %c0_2] : memref<128x896xbf16, #tpu.memory_space<vmem>>, vector<128x256xbf16>
    %c0_3 = arith.constant 0 : index
    %c0_4 = arith.constant 0 : index
    %4 = vector.load %arg3[%c0_3, %c0_4] : memref<1x896xf32, #tpu.memory_space<vmem>>, vector<1x256xf32>
    %5 = arith.truncf %2 : vector<16x128xf32> to vector<16x128xbf16>
    %cst_5 = arith.constant dense<0.000000e+00> : vector<16x256xf32>
    %6 = tpu.matmul %5, %3, %cst_5 {dimension_numbers = #tpu.dot_dimension_numbers<[1], [0], [0], [1], [0, 0, 1, 1], [], []>} : vector<16x128xbf16>, vector<128x256xbf16>, vector<16x256xf32> -> vector<16x256xf32>
    %7 = vector.broadcast %4 : vector<1x256xf32> to vector<16x256xf32>
    %8 = arith.addf %6, %7 : vector<16x256xf32>
    %9 = vector.extract_strided_slice %8 {offsets = [0, 0], sizes = [16, 128], strides = [1, 1]} : vector<16x256xf32> to vector<16x128xf32>
    %10 = arith.addf %9, %0 : vector<16x128xf32>
    %11 = vector.extract_strided_slice %8 {offsets = [0, 128], sizes = [16, 128], strides = [1, 1]} : vector<16x256xf32> to vector<16x128xf32>
    %12 = arith.addf %11, %0 : vector<16x128xf32>
    %13 = tpu.concatenate %10, %12 in 0 : vector<16x128xf32>, vector<16x128xf32> -> vector<32x128xf32>
    %cst_6 = arith.constant 0.000000e+00 : f32
    %14 = vector.broadcast %cst_6 : f32 to vector<32x128xf32>
    %15 = arith.maximumf %13, %14 : vector<32x128xf32>
    %c0_7 = arith.constant 0 : index
    %c256 = arith.constant 256 : index
    %16 = vector.load %arg2[%c0_7, %c256] : memref<128x896xbf16, #tpu.memory_space<vmem>>, vector<128x128xbf16>
    %c0_8 = arith.constant 0 : index
    %c256_9 = arith.constant 256 : index
    %17 = vector.load %arg3[%c0_8, %c256_9] : memref<1x896xf32, #tpu.memory_space<vmem>>, vector<1x128xf32>
    %18 = arith.truncf %15 : vector<32x128xf32> to vector<32x128xbf16>
    %cst_10 = arith.constant dense<0.000000e+00> : vector<32x128xf32>
    %19 = tpu.matmul %18, %16, %cst_10 {dimension_numbers = #tpu.dot_dimension_numbers<[1], [0], [0], [1], [0, 0, 1, 1], [], []>} : vector<32x128xbf16>, vector<128x128xbf16>, vector<32x128xf32> -> vector<32x128xf32>
    %20 = vector.broadcast %17 : vector<1x128xf32> to vector<32x128xf32>
    %21 = arith.addf %19, %20 : vector<32x128xf32>
    %cst_11 = arith.constant 0.000000e+00 : f32
    %22 = vector.broadcast %cst_11 : f32 to vector<32x128xf32>
    %23 = arith.maximumf %21, %22 : vector<32x128xf32>
    %c0_12 = arith.constant 0 : index
    %c384 = arith.constant 384 : index
    %24 = vector.load %arg2[%c0_12, %c384] : memref<128x896xbf16, #tpu.memory_space<vmem>>, vector<128x256xbf16>
    %c0_13 = arith.constant 0 : index
    %c384_14 = arith.constant 384 : index
    %25 = vector.load %arg3[%c0_13, %c384_14] : memref<1x896xf32, #tpu.memory_space<vmem>>, vector<1x256xf32>
    %26 = arith.truncf %23 : vector<32x128xf32> to vector<32x128xbf16>
    %cst_15 = arith.constant dense<0.000000e+00> : vector<32x256xf32>
    %27 = tpu.matmul %26, %24, %cst_15 {dimension_numbers = #tpu.dot_dimension_numbers<[1], [0], [0], [1], [0, 0, 1, 1], [], []>} : vector<32x128xbf16>, vector<128x256xbf16>, vector<32x256xf32> -> vector<32x256xf32>
    %28 = vector.broadcast %25 : vector<1x256xf32> to vector<32x256xf32>
    %29 = arith.addf %27, %28 : vector<32x256xf32>
    %30 = tpu.concatenate %0, %0 in 0 : vector<16x128xf32>, vector<16x128xf32> -> vector<32x128xf32>
    %31 = vector.extract_strided_slice %29 {offsets = [0, 0], sizes = [32, 128], strides = [1, 1]} : vector<32x256xf32> to vector<32x128xf32>
    %32 = arith.addf %31, %30 : vector<32x128xf32>
    %33 = vector.extract_strided_slice %29 {offsets = [0, 128], sizes = [32, 128], strides = [1, 1]} : vector<32x256xf32> to vector<32x128xf32>
    %34 = arith.addf %33, %30 : vector<32x128xf32>
    %35 = tpu.concatenate %32, %34 in 0 : vector<32x128xf32>, vector<32x128xf32> -> vector<64x128xf32>
    %cst_16 = arith.constant 0.000000e+00 : f32
    %36 = vector.broadcast %cst_16 : f32 to vector<64x128xf32>
    %37 = arith.maximumf %35, %36 : vector<64x128xf32>
    %c0_17 = arith.constant 0 : index
    %c640 = arith.constant 640 : index
    %38 = vector.load %arg2[%c0_17, %c640] : memref<128x896xbf16, #tpu.memory_space<vmem>>, vector<128x128xbf16>
    %c0_18 = arith.constant 0 : index
    %c640_19 = arith.constant 640 : index
    %39 = vector.load %arg3[%c0_18, %c640_19] : memref<1x896xf32, #tpu.memory_space<vmem>>, vector<1x128xf32>
    %40 = arith.truncf %37 : vector<64x128xf32> to vector<64x128xbf16>
    %cst_20 = arith.constant dense<0.000000e+00> : vector<64x128xf32>
    %41 = tpu.matmul %40, %38, %cst_20 {dimension_numbers = #tpu.dot_dimension_numbers<[1], [0], [0], [1], [0, 0, 1, 1], [], []>} : vector<64x128xbf16>, vector<128x128xbf16>, vector<64x128xf32> -> vector<64x128xf32>
    %42 = vector.broadcast %39 : vector<1x128xf32> to vector<64x128xf32>
    %43 = arith.addf %41, %42 : vector<64x128xf32>
    %cst_21 = arith.constant 0.000000e+00 : f32
    %44 = vector.broadcast %cst_21 : f32 to vector<64x128xf32>
    %45 = arith.maximumf %43, %44 : vector<64x128xf32>
    %c0_22 = arith.constant 0 : index
    %c768 = arith.constant 768 : index
    %46 = vector.load %arg2[%c0_22, %c768] : memref<128x896xbf16, #tpu.memory_space<vmem>>, vector<128x128xbf16>
    %c0_23 = arith.constant 0 : index
    %c768_24 = arith.constant 768 : index
    %47 = vector.load %arg3[%c0_23, %c768_24] : memref<1x896xf32, #tpu.memory_space<vmem>>, vector<1x128xf32>
    %48 = arith.truncf %45 : vector<64x128xf32> to vector<64x128xbf16>
    %cst_25 = arith.constant dense<0.000000e+00> : vector<64x128xf32>
    %49 = tpu.matmul %48, %46, %cst_25 {dimension_numbers = #tpu.dot_dimension_numbers<[1], [0], [0], [1], [0, 0, 1, 1], [], []>} : vector<64x128xbf16>, vector<128x128xbf16>, vector<64x128xf32> -> vector<64x128xf32>
    %50 = vector.broadcast %47 : vector<1x128xf32> to vector<64x128xf32>
    %51 = arith.addf %49, %50 : vector<64x128xf32>
    %cst_26 = arith.constant 0.000000e+00 : f32
    %52 = vector.broadcast %cst_26 : f32 to vector<64x128xf32>
    %53 = arith.maximumf %51, %52 : vector<64x128xf32>
    %54 = vector.extract_strided_slice %53 {offsets = [0, 0], sizes = [16, 128], strides = [1, 1]} : vector<64x128xf32> to vector<16x128xf32>
    %c0_27 = arith.constant 0 : index
    %c0_28 = arith.constant 0 : index
    %55 = vector.load %arg4[%c0_27, %c0_28] : memref<16x512xf32, #tpu.memory_space<vmem>>, vector<16x128xf32>
    tpu.vector_store %arg4[%c0_27, %c0_28], %54 {strides = array<i32>} : memref<16x512xf32, #tpu.memory_space<vmem>>, vector<16x128xf32>,
    %56 = vector.extract_strided_slice %53 {offsets = [16, 0], sizes = [16, 128], strides = [1, 1]} : vector<64x128xf32> to vector<16x128xf32>
    %c0_29 = arith.constant 0 : index
    %c128 = arith.constant 128 : index
    %57 = vector.load %arg4[%c0_29, %c128] : memref<16x512xf32, #tpu.memory_space<vmem>>, vector<16x128xf32>
    tpu.vector_store %arg4[%c0_29, %c128], %56 {strides = array<i32>} : memref<16x512xf32, #tpu.memory_space<vmem>>, vector<16x128xf32>,
    %58 = vector.extract_strided_slice %53 {offsets = [32, 0], sizes = [16, 128], strides = [1, 1]} : vector<64x128xf32> to vector<16x128xf32>
    %c0_30 = arith.constant 0 : index
    %c256_31 = arith.constant 256 : index
    %59 = vector.load %arg4[%c0_30, %c256_31] : memref<16x512xf32, #tpu.memory_space<vmem>>, vector<16x128xf32>
    tpu.vector_store %arg4[%c0_30, %c256_31], %58 {strides = array<i32>} : memref<16x512xf32, #tpu.memory_space<vmem>>, vector<16x128xf32>,
    %60 = vector.extract_strided_slice %53 {offsets = [48, 0], sizes = [16, 128], strides = [1, 1]} : vector<64x128xf32> to vector<16x128xf32>
    %c0_32 = arith.constant 0 : index
    %c384_33 = arith.constant 384 : index
    %61 = vector.load %arg4[%c0_32, %c384_33] : memref<16x512xf32, #tpu.memory_space<vmem>>, vector<16x128xf32>
    tpu.vector_store %arg4[%c0_32, %c384_33], %60 {strides = array<i32>} : memref<16x512xf32, #tpu.memory_space<vmem>>, vector<16x128xf32>,
    return
  }
  func.func @transform_0(%arg0: i32) -> (i32, i32) {
    %c0_i32 = arith.constant 0 : i32
    %c0_i32_0 = arith.constant 0 : i32
    return %arg0, %c0_i32 : i32, i32
  }
  func.func @transform_1(%arg0: i32) -> (i32, i32) {
    %c0_i32 = arith.constant 0 : i32
    %c0_i32_0 = arith.constant 0 : i32
    %c0_i32_1 = arith.constant 0 : i32
    return %c0_i32, %c0_i32_0 : i32, i32
  }
  func.func @transform_2(%arg0: i32) -> (i32, i32) {
    %c0_i32 = arith.constant 0 : i32
    %c0_i32_0 = arith.constant 0 : i32
    %c0_i32_1 = arith.constant 0 : i32
    return %c0_i32, %c0_i32_0 : i32, i32
  }
  func.func @transform_3(%arg0: i32) -> (i32, i32) {
    %c0_i32 = arith.constant 0 : i32
    %c0_i32_0 = arith.constant 0 : i32
    return %arg0, %c0_i32 : i32, i32
  }
}

</mosaic_0001>

<llo_original>
// kernel: tpu_custom_call.1
$region0: #{tpu_custom_call.1}
  #allocation0 [shape = 'u32[]', space=smem, size = 0x4, offset = 0x4, fixed_abs, tag = 'smem constant byte address 0x4 - core index']
  #allocation1 [shape = 'u32[144,128]{1,0:T(1,128)}', space=vmem, size = 0x12000, scoped, tag = 'internal scratch']
  %s0 = inlined_call_operand.hbm [shape: f32[16,128], index: 0, kind: input, shape index: {}]
  %s1 = inlined_call_operand.hbm [shape: bf16[128,896], index: 1, kind: input, shape index: {}]
  %s2 = inlined_call_operand.vmem [shape: f32[1,896], index: 2, kind: input, shape index: {}]
  %s3 = inlined_call_operand.hbm [shape: f32[16,512], index: 3, kind: output, shape index: {}]
  %s4 = sld [smem:[#allocation0]]
  $region30: #{tpu_custom_call.1} parent=0
    _
  %s6 = ssub.s32 1, %s4
  %s7 = scalar_select 0, %s6, %s4
  $region1: #{tpu_custom_call.1} parent=0
    #allocation2 [shape = 'u8[8192]{0}', space=vmem, size = 0x2000, scoped, tag = 'input window, operand 0, single buffered']
    #allocation3 [shape = 's32[1]{0}', space=sflag, size = 0x4, scoped, tag = 'scoped memory for tpu_custom_call.1']
    #allocation4 [shape = 's32[1]{0}', space=sflag, size = 0x4, scoped, tag = 'scoped memory for tpu_custom_call.1']
    #allocation5 [shape = 'u8[229376]{0}', space=vmem, size = 0x38000, scoped, tag = 'input window, operand 1, single buffered']
    #allocation6 [shape = 's32[1]{0}', space=sflag, size = 0x4, scoped, tag = 'scoped memory for tpu_custom_call.1']
    #allocation7 [shape = 'u8[32768]{0}', space=vmem, size = 0x8000, scoped, tag = 'output window, operand 0, single buffered']
    %8 = vsyncpa [#allocation3], 0
    %9 = vsyncpa [#allocation6], 0
    %10 = vsyncpa [#allocation4], 0
    // Predicated region
    $region2: #{tpu_custom_call.1} parent=1 // pred_check
      _
    $region3: #{tpu_custom_call.1} parent=1 // pred_check_branch
      %12 = sbr.rel (0) target = $region5
    $region4: #{tpu_custom_call.1} parent=1 // pred_region
      %s14 = ssub.s32 256, 256
      %15 = vsyncadd [#allocation3], %s14
      %s16 = sshll.u32 [#allocation2], 4
      %s17 = int_to_ptr.vmem [resolvable:$true] %s16
      %22 = dma.hbm_to_vmem [thread:$0]  %s0, 256, %s17, [#allocation3], 128, 128, 8
    $region5: #{tpu_custom_call.1} parent=1 // pred_fallthru
      _
    // Predicated region
    $region6: #{tpu_custom_call.1} parent=1 // pred_check
      _
    $region7: #{tpu_custom_call.1} parent=1 // pred_check_branch
      %24 = sbr.rel (0) target = $region9
    $region8: #{tpu_custom_call.1} parent=1 // pred_region
      %s26 = ssub.s32 7168, 7168
      %27 = vsyncadd [#allocation6], %s26
      %s28 = sshll.u32 [#allocation5], 4
      %s29 = int_to_ptr.vmem [resolvable:$true] %s28
      %34 = dma.hbm_to_vmem [thread:$0]  %s1, 7168, %s29, [#allocation6], 448, 448, 28
    $region9: #{tpu_custom_call.1} parent=1 // pred_fallthru
      _
    // Predicated region
    $region10: #{tpu_custom_call.1} parent=1 // pred_check
      _
    $region11: #{tpu_custom_call.1} parent=1 // pred_check_branch
      %36 = sbr.rel (0) target = $region13
    $region12: #{tpu_custom_call.1} parent=1 // pred_region
      _
    $region13: #{tpu_custom_call.1} parent=1 // pred_fallthru
      _
    // Predicated region
    $region14: #{tpu_custom_call.1} parent=1 // pred_check
      _
    $region15: #{tpu_custom_call.1} parent=1 // pred_check_branch
      %38 = sbr.rel (0) target = $region17
    $region16: #{tpu_custom_call.1} parent=1 // pred_region
      %39 = dma.done [#allocation3], 256
    $region17: #{tpu_custom_call.1} parent=1 // pred_fallthru
      _
    // Predicated region
    $region18: #{tpu_custom_call.1} parent=1 // pred_check
      _
    $region19: #{tpu_custom_call.1} parent=1 // pred_check_branch
      %41 = sbr.rel (0) target = $region21
    $region20: #{tpu_custom_call.1} parent=1 // pred_region
      %42 = dma.done [#allocation6], 7168
    $region21: #{tpu_custom_call.1} parent=1 // pred_fallthru
      _
    %v44 = vld [vmem:[#allocation2] sm:$0xff]
    %v45 = vld [vmem:[#allocation2 + $0x8] sm:$0xff]
    %v46 = vmax.f32 %v44, 0.0
    %v47 = vmax.f32 %v45, 0.0
    %v48 = vld [vmem:[#allocation5] sm:$0xff]
    %v49 = vld [vmem:[#allocation5 + $0x1c] sm:$0xff]
    %v50 = vld [vmem:[#allocation5 + $0x38] sm:$0xff]
    %v51 = vld [vmem:[#allocation5 + $0x54] sm:$0xff]
    %v52 = vld [vmem:[#allocation5 + $0x70] sm:$0xff]
    %v53 = vld [vmem:[#allocation5 + $0x8c] sm:$0xff]
    %v54 = vld [vmem:[#allocation5 + $0xa8] sm:$0xff]
    %v55 = vld [vmem:[#allocation5 + $0xc4] sm:$0xff]
    %v56 = vld [vmem:[#allocation5 + $0xe0] sm:$0xff]
    %v57 = vld [vmem:[#allocation5 + $0xfc] sm:$0xff]
    %v58 = vld [vmem:[#allocation5 + $0x118] sm:$0xff]
    %v59 = vld [vmem:[#allocation5 + $0x134] sm:$0xff]
    %v60 = vld [vmem:[#allocation5 + $0x150] sm:$0xff]
    %v61 = vld [vmem:[#allocation5 + $0x16c] sm:$0xff]
    %v62 = vld [vmem:[#allocation5 + $0x188] sm:$0xff]
    %v63 = vld [vmem:[#allocation5 + $0x1a4] sm:$0xff]
    %v64 = vld [vmem:[%s2] sm:$0x3]
    %v65 = vpack.c.bf16 %v47, %v46
    %v67 = vlaneseq
    %v68 = vshrl.u32 %v67, 7
    %v69 = vsub.s32 0, %v68
    %v70 = vrot.slane %v64, %v69
    %v71 = vlaneseq
    %v72 = vshrl.u32 %v71, 7
    %v73 = vsub.s32 1, %v72
    %v74 = vrot.slane %v64, %v73
    %v93 = vunpack.c.l.b16 %v48
    %v94 = vunpack.c.h.b16 %v48
    %v95 = vunpack.c.l.b16 %v49
    %v96 = vunpack.c.h.b16 %v49
    %v97 = vunpack.c.l.b16 %v50
    %v98 = vunpack.c.h.b16 %v50
    %v99 = vunpack.c.l.b16 %v51
    %v100 = vunpack.c.h.b16 %v51
    %v101 = vunpack.c.l.b16 %v52
    %v102 = vunpack.c.h.b16 %v52
    %v103 = vunpack.c.l.b16 %v53
    %v104 = vunpack.c.h.b16 %v53
    %v105 = vunpack.c.l.b16 %v54
    %v106 = vunpack.c.h.b16 %v54
    %v107 = vunpack.c.l.b16 %v55
    %v108 = vunpack.c.h.b16 %v55
    %v109 = vunpack.c.l.b16 %v56
    %v110 = vunpack.c.h.b16 %v56
    %v111 = vunpack.c.l.b16 %v57
    %v112 = vunpack.c.h.b16 %v57
    %v113 = vunpack.c.l.b16 %v58
    %v114 = vunpack.c.h.b16 %v58
    %v115 = vunpack.c.l.b16 %v59
    %v116 = vunpack.c.h.b16 %v59
    %v117 = vunpack.c.l.b16 %v60
    %v118 = vunpack.c.h.b16 %v60
    %v119 = vunpack.c.l.b16 %v61
    %v120 = vunpack.c.h.b16 %v61
    %v121 = vunpack.c.l.b16 %v62
    %v122 = vunpack.c.h.b16 %v62
    %v123 = vunpack.c.l.b16 %v63
    %v124 = vunpack.c.h.b16 %v63
    %v125 = vpack.c.b16 %v95, %v93
    %v126 = vpack.c.b16 %v96, %v94
    %v127 = vpack.c.b16 %v99, %v97
    %v128 = vpack.c.b16 %v100, %v98
    %v129 = vpack.c.b16 %v103, %v101
    %v130 = vpack.c.b16 %v104, %v102
    %v131 = vpack.c.b16 %v107, %v105
    %v132 = vpack.c.b16 %v108, %v106
    %v133 = vpack.c.b16 %v111, %v109
    %v134 = vpack.c.b16 %v112, %v110
    %v135 = vpack.c.b16 %v115, %v113
    %v136 = vpack.c.b16 %v116, %v114
    %v137 = vpack.c.b16 %v119, %v117
    %v138 = vpack.c.b16 %v120, %v118
    %v139 = vpack.c.b16 %v123, %v121
    %v140 = vpack.c.b16 %v124, %v122
    %157 = vmatprep.subr.bf16.mxu0 %v126
    %158 = vmatpush1.bf16.msra.mxu0 %v125
    %159 = vmatprep.subr.bf16.mxu0 %v128
    %160 = vmatpush1.bf16.msra.mxu0 %v127
    %161 = vmatprep.subr.bf16.mxu0 %v130
    %162 = vmatpush1.bf16.msra.mxu0 %v129
    %163 = vmatprep.subr.bf16.mxu0 %v132
    %164 = vmatpush1.bf16.msra.mxu0 %v131
    %165 = vmatprep.subr.bf16.mxu0 %v134
    %166 = vmatpush1.bf16.msra.mxu0 %v133
    %167 = vmatprep.subr.bf16.mxu0 %v136
    %168 = vmatpush1.bf16.msra.mxu0 %v135
    %169 = vmatprep.subr.bf16.mxu0 %v138
    %170 = vmatpush1.bf16.msra.mxu0 %v137
    %171 = vmatprep.subr.bf16.mxu0 %v140
    %172 = vmatpush1.bf16.msra.mxu0 %v139
    %173 = vmatprep.subr.bf16.mxu0 0
    %174 = vmatpush1.bf16.msra.mxu0 0
    %175 = vmatprep.subr.bf16.mxu0 0
    %176 = vmatpush1.bf16.msra.mxu0 0
    %177 = vmatprep.subr.bf16.mxu0 0
    %178 = vmatpush1.bf16.msra.mxu0 0
    %179 = vmatprep.subr.bf16.mxu0 0
    %180 = vmatpush1.bf16.msra.mxu0 0
    %181 = vmatprep.subr.bf16.mxu0 0
    %182 = vmatpush1.bf16.msra.mxu0 0
    %183 = vmatprep.subr.bf16.mxu0 0
    %184 = vmatpush1.bf16.msra.mxu0 0
    %185 = vmatprep.subr.bf16.mxu0 0
    %186 = vmatpush1.bf16.msra.mxu0 0
    %187 = vmatprep.subr.bf16.mxu0 0
    %188 = vmatpush1.bf16.msra.mxu0 0
    %189 = vmatprep.mubr.bf16.mxu0 0
    %190 = vmatmul.mubr.bf16.gmra.mrb[0].mxu0 %v65
    %v191 = vpop.f32.mrb[0].mxu0
    %v192 = vadd.f32 %v70, %v191
    %v193 = vpop.f32.mrb[0].mxu0
    %v194 = vadd.f32 %v74, %v193
    %v195 = vpop.f32.mrb[0].mxu0
    %v196 = vadd.f32 %v70, %v195
    %v197 = vpop.f32.mrb[0].mxu0
    %v198 = vadd.f32 %v74, %v197
    %199 = vdwg.mxu0
    %v200 = vadd.f32 %v192, %v44
    %v201 = vadd.f32 %v196, %v45
    %v202 = vadd.f32 %v194, %v44
    %v203 = vadd.f32 %v198, %v45
    %v204 = vmax.f32 %v200, 0.0
    %v205 = vmax.f32 %v201, 0.0
    %v206 = vmax.f32 %v202, 0.0
    %v207 = vmax.f32 %v203, 0.0
    %v208 = vld [vmem:[#allocation5 + $0x8] sm:$0xf]
    %v209 = vld [vmem:[#allocation5 + $0x24] sm:$0xf]
    %v210 = vld [vmem:[#allocation5 + $0x40] sm:$0xf]
    %v211 = vld [vmem:[#allocation5 + $0x5c] sm:$0xf]
    %v212 = vld [vmem:[#allocation5 + $0x78] sm:$0xf]
    %v213 = vld [vmem:[#allocation5 + $0x94] sm:$0xf]
    %v214 = vld [vmem:[#allocation5 + $0xb0] sm:$0xf]
    %v215 = vld [vmem:[#allocation5 + $0xcc] sm:$0xf]
    %v216 = vld [vmem:[#allocation5 + $0xe8] sm:$0xf]
    %v217 = vld [vmem:[#allocation5 + $0x104] sm:$0xf]
    %v218 = vld [vmem:[#allocation5 + $0x120] sm:$0xf]
    %v219 = vld [vmem:[#allocation5 + $0x13c] sm:$0xf]
    %v220 = vld [vmem:[#allocation5 + $0x158] sm:$0xf]
    %v221 = vld [vmem:[#allocation5 + $0x174] sm:$0xf]
    %v222 = vld [vmem:[#allocation5 + $0x190] sm:$0xf]
    %v223 = vld [vmem:[#allocation5 + $0x1ac] sm:$0xf]
    %v224 = vld [vmem:[%s2 + $0x2] sm:$0x1]
    %v225 = vpack.c.bf16 %v205, %v204
    %v226 = vpack.c.bf16 %v207, %v206
    %v228 = vlaneseq
    %v229 = vshrl.u32 %v228, 7
    %v230 = vsub.s32 0, %v229
    %v231 = vrot.slane %v224, %v230
    %v249 = vunpack.c.l.b16 %v208
    %v250 = vunpack.c.l.b16 %v209
    %v251 = vunpack.c.l.b16 %v210
    %v252 = vunpack.c.l.b16 %v211
    %v253 = vunpack.c.l.b16 %v212
    %v254 = vunpack.c.l.b16 %v213
    %v255 = vunpack.c.l.b16 %v214
    %v256 = vunpack.c.l.b16 %v215
    %v257 = vunpack.c.l.b16 %v216
    %v258 = vunpack.c.l.b16 %v217
    %v259 = vunpack.c.l.b16 %v218
    %v260 = vunpack.c.l.b16 %v219
    %v261 = vunpack.c.l.b16 %v220
    %v262 = vunpack.c.l.b16 %v221
    %v263 = vunpack.c.l.b16 %v222
    %v264 = vunpack.c.l.b16 %v223
    %v265 = vpack.c.b16 %v250, %v249
    %v266 = vpack.c.b16 %v252, %v251
    %v267 = vpack.c.b16 %v254, %v253
    %v268 = vpack.c.b16 %v256, %v255
    %v269 = vpack.c.b16 %v258, %v257
    %v270 = vpack.c.b16 %v260, %v259
    %v271 = vpack.c.b16 %v262, %v261
    %v272 = vpack.c.b16 %v264, %v263
    %281 = vmatprep.subr.bf16.mxu0 0
    %282 = vmatpush1.bf16.msra.mxu0 %v265
    %283 = vmatprep.subr.bf16.mxu0 0
    %284 = vmatpush1.bf16.msra.mxu0 %v266
    %285 = vmatprep.subr.bf16.mxu0 0
    %286 = vmatpush1.bf16.msra.mxu0 %v267
    %287 = vmatprep.subr.bf16.mxu0 0
    %288 = vmatpush1.bf16.msra.mxu0 %v268
    %289 = vmatprep.subr.bf16.mxu0 0
    %290 = vmatpush1.bf16.msra.mxu0 %v269
    %291 = vmatprep.subr.bf16.mxu0 0
    %292 = vmatpush1.bf16.msra.mxu0 %v270
    %293 = vmatprep.subr.bf16.mxu0 0
    %294 = vmatpush1.bf16.msra.mxu0 %v271
    %295 = vmatprep.subr.bf16.mxu0 0
    %296 = vmatpush1.bf16.msra.mxu0 %v272
    %297 = vmatprep.subr.bf16.mxu0 0
    %298 = vmatpush1.bf16.msra.mxu0 0
    %299 = vmatprep.subr.bf16.mxu0 0
    %300 = vmatpush1.bf16.msra.mxu0 0
    %301 = vmatprep.subr.bf16.mxu0 0
    %302 = vmatpush1.bf16.msra.mxu0 0
    %303 = vmatprep.subr.bf16.mxu0 0
    %304 = vmatpush1.bf16.msra.mxu0 0
    %305 = vmatprep.subr.bf16.mxu0 0
    %306 = vmatpush1.bf16.msra.mxu0 0
    %307 = vmatprep.subr.bf16.mxu0 0
    %308 = vmatpush1.bf16.msra.mxu0 0
    %309 = vmatprep.subr.bf16.mxu0 0
    %310 = vmatpush1.bf16.msra.mxu0 0
    %311 = vmatprep.subr.bf16.mxu0 0
    %312 = vmatpush1.bf16.msra.mxu0 0
    %313 = vmatprep.mubr.bf16.mxu0 0
    %314 = vmatmul.mubr.bf16.gmra.mrb[0].mxu0 %v225
    %v315 = vpop.f32.mrb[0].mxu0
    %v316 = vadd.f32 %v231, %v315
    %v317 = vpop.f32.mrb[0].mxu0
    %v318 = vpop.f32.mrb[0].mxu0
    %v319 = vadd.f32 %v231, %v318
    %v320 = vpop.f32.mrb[0].mxu0
    %321 = vmatprep.mubr.bf16.mxu0 0
    %322 = vmatmul.mubr.bf16.gmra.mrb[0].mxu0 %v226
    %v323 = vpop.f32.mrb[0].mxu0
    %v324 = vadd.f32 %v231, %v323
    %v325 = vpop.f32.mrb[0].mxu0
    %v326 = vpop.f32.mrb[0].mxu0
    %v327 = vadd.f32 %v231, %v326
    %v328 = vpop.f32.mrb[0].mxu0
    %329 = vdwg.mxu0
    %v330 = vmax.f32 %v316, 0.0
    %v331 = vmax.f32 %v319, 0.0
    %v332 = vmax.f32 %v324, 0.0
    %v333 = vmax.f32 %v327, 0.0
    %v334 = vld [vmem:[#allocation5 + $0xc] sm:$0xff]
    %v335 = vld [vmem:[#allocation5 + $0x28] sm:$0xff]
    %v336 = vld [vmem:[#allocation5 + $0x44] sm:$0xff]
    %v337 = vld [vmem:[#allocation5 + $0x60] sm:$0xff]
    %v338 = vld [vmem:[#allocation5 + $0x7c] sm:$0xff]
    %v339 = vld [vmem:[#allocation5 + $0x98] sm:$0xff]
    %v340 = vld [vmem:[#allocation5 + $0xb4] sm:$0xff]
    %v341 = vld [vmem:[#allocation5 + $0xd0] sm:$0xff]
    %v342 = vld [vmem:[#allocation5 + $0xec] sm:$0xff]
    %v343 = vld [vmem:[#allocation5 + $0x108] sm:$0xff]
    %v344 = vld [vmem:[#allocation5 + $0x124] sm:$0xff]
    %v345 = vld [vmem:[#allocation5 + $0x140] sm:$0xff]
    %v346 = vld [vmem:[#allocation5 + $0x15c] sm:$0xff]
    %v347 = vld [vmem:[#allocation5 + $0x178] sm:$0xff]
    %v348 = vld [vmem:[#allocation5 + $0x194] sm:$0xff]
    %v349 = vld [vmem:[#allocation5 + $0x1b0] sm:$0xff]
    %v350 = vld [vmem:[%s2 + $0x3] sm:$0x3]
    %v351 = vpack.c.bf16 %v331, %v330
    %v352 = vpack.c.bf16 %v333, %v332
    %v354 = vlaneseq
    %v355 = vshrl.u32 %v354, 7
    %v356 = vsub.s32 0, %v355
    %v357 = vrot.slane %v350, %v356
    %v358 = vlaneseq
    %v359 = vshrl.u32 %v358, 7
    %v360 = vsub.s32 1, %v359
    %v361 = vrot.slane %v350, %v360
    %v380 = vunpack.c.l.b16 %v334
    %v381 = vunpack.c.h.b16 %v334
    %v382 = vunpack.c.l.b16 %v335
    %v383 = vunpack.c.h.b16 %v335
    %v384 = vunpack.c.l.b16 %v336
    %v385 = vunpack.c.h.b16 %v336
    %v386 = vunpack.c.l.b16 %v337
    %v387 = vunpack.c.h.b16 %v337
    %v388 = vunpack.c.l.b16 %v338
    %v389 = vunpack.c.h.b16 %v338
    %v390 = vunpack.c.l.b16 %v339
    %v391 = vunpack.c.h.b16 %v339
    %v392 = vunpack.c.l.b16 %v340
    %v393 = vunpack.c.h.b16 %v340
    %v394 = vunpack.c.l.b16 %v341
    %v395 = vunpack.c.h.b16 %v341
    %v396 = vunpack.c.l.b16 %v342
    %v397 = vunpack.c.h.b16 %v342
    %v398 = vunpack.c.l.b16 %v343
    %v399 = vunpack.c.h.b16 %v343
    %v400 = vunpack.c.l.b16 %v344
    %v401 = vunpack.c.h.b16 %v344
    %v402 = vunpack.c.l.b16 %v345
    %v403 = vunpack.c.h.b16 %v345
    %v404 = vunpack.c.l.b16 %v346
    %v405 = vunpack.c.h.b16 %v346
    %v406 = vunpack.c.l.b16 %v347
    %v407 = vunpack.c.h.b16 %v347
    %v408 = vunpack.c.l.b16 %v348
    %v409 = vunpack.c.h.b16 %v348
    %v410 = vunpack.c.l.b16 %v349
    %v411 = vunpack.c.h.b16 %v349
    %v412 = vpack.c.b16 %v382, %v380
    %v413 = vpack.c.b16 %v383, %v381
    %v414 = vpack.c.b16 %v386, %v384
    %v415 = vpack.c.b16 %v387, %v385
    %v416 = vpack.c.b16 %v390, %v388
    %v417 = vpack.c.b16 %v391, %v389
    %v418 = vpack.c.b16 %v394, %v392
    %v419 = vpack.c.b16 %v395, %v393
    %v420 = vpack.c.b16 %v398, %v396
    %v421 = vpack.c.b16 %v399, %v397
    %v422 = vpack.c.b16 %v402, %v400
    %v423 = vpack.c.b16 %v403, %v401
    %v424 = vpack.c.b16 %v406, %v404
    %v425 = vpack.c.b16 %v407, %v405
    %v426 = vpack.c.b16 %v410, %v408
    %v427 = vpack.c.b16 %v411, %v409
    %444 = vmatprep.subr.bf16.mxu0 %v413
    %445 = vmatpush1.bf16.msra.mxu0 %v412
    %446 = vmatprep.subr.bf16.mxu0 %v415
    %447 = vmatpush1.bf16.msra.mxu0 %v414
    %448 = vmatprep.subr.bf16.mxu0 %v417
    %449 = vmatpush1.bf16.msra.mxu0 %v416
    %450 = vmatprep.subr.bf16.mxu0 %v419
    %451 = vmatpush1.bf16.msra.mxu0 %v418
    %452 = vmatprep.subr.bf16.mxu0 %v421
    %453 = vmatpush1.bf16.msra.mxu0 %v420
    %454 = vmatprep.subr.bf16.mxu0 %v423
    %455 = vmatpush1.bf16.msra.mxu0 %v422
    %456 = vmatprep.subr.bf16.mxu0 %v425
    %457 = vmatpush1.bf16.msra.mxu0 %v424
    %458 = vmatprep.subr.bf16.mxu0 %v427
    %459 = vmatpush1.bf16.msra.mxu0 %v426
    %460 = vmatprep.subr.bf16.mxu0 0
    %461 = vmatpush1.bf16.msra.mxu0 0
    %462 = vmatprep.subr.bf16.mxu0 0
    %463 = vmatpush1.bf16.msra.mxu0 0
    %464 = vmatprep.subr.bf16.mxu0 0
    %465 = vmatpush1.bf16.msra.mxu0 0
    %466 = vmatprep.subr.bf16.mxu0 0
    %467 = vmatpush1.bf16.msra.mxu0 0
    %468 = vmatprep.subr.bf16.mxu0 0
    %469 = vmatpush1.bf16.msra.mxu0 0
    %470 = vmatprep.subr.bf16.mxu0 0
    %471 = vmatpush1.bf16.msra.mxu0 0
    %472 = vmatprep.subr.bf16.mxu0 0
    %473 = vmatpush1.bf16.msra.mxu0 0
    %474 = vmatprep.subr.bf16.mxu0 0
    %475 = vmatpush1.bf16.msra.mxu0 0
    %476 = vmatprep.mubr.bf16.mxu0 0
    %477 = vmatmul.mubr.bf16.gmra.mrb[0].mxu0 %v351
    %v478 = vpop.f32.mrb[0].mxu0
    %v479 = vadd.f32 %v357, %v478
    %v480 = vpop.f32.mrb[0].mxu0
    %v481 = vadd.f32 %v361, %v480
    %v482 = vpop.f32.mrb[0].mxu0
    %v483 = vadd.f32 %v357, %v482
    %v484 = vpop.f32.mrb[0].mxu0
    %v485 = vadd.f32 %v361, %v484
    %486 = vmatprep.mubr.bf16.mxu0 0
    %487 = vmatmul.mubr.bf16.gmra.mrb[0].mxu0 %v352
    %v488 = vpop.f32.mrb[0].mxu0
    %v489 = vadd.f32 %v357, %v488
    %v490 = vpop.f32.mrb[0].mxu0
    %v491 = vadd.f32 %v361, %v490
    %v492 = vpop.f32.mrb[0].mxu0
    %v493 = vadd.f32 %v357, %v492
    %v494 = vpop.f32.mrb[0].mxu0
    %v495 = vadd.f32 %v361, %v494
    %496 = vdwg.mxu0
    %v497 = vadd.f32 %v479, %v44
    %v498 = vadd.f32 %v483, %v45
    %v499 = vadd.f32 %v489, %v44
    %v500 = vadd.f32 %v493, %v45
    %v501 = vadd.f32 %v481, %v44
    %v502 = vadd.f32 %v485, %v45
    %v503 = vadd.f32 %v491, %v44
    %v504 = vadd.f32 %v495, %v45
    %v505 = vmax.f32 %v497, 0.0
    %v506 = vmax.f32 %v498, 0.0
    %v507 = vmax.f32 %v499, 0.0
    %v508 = vmax.f32 %v500, 0.0
    %v509 = vmax.f32 %v501, 0.0
    %v510 = vmax.f32 %v502, 0.0
    %v511 = vmax.f32 %v503, 0.0
    %v512 = vmax.f32 %v504, 0.0
    %v513 = vld [vmem:[#allocation5 + $0x14] sm:$0xf]
    %v514 = vld [vmem:[#allocation5 + $0x30] sm:$0xf]
    %v515 = vld [vmem:[#allocation5 + $0x4c] sm:$0xf]
    %v516 = vld [vmem:[#allocation5 + $0x68] sm:$0xf]
    %v517 = vld [vmem:[#allocation5 + $0x84] sm:$0xf]
    %v518 = vld [vmem:[#allocation5 + $0xa0] sm:$0xf]
    %v519 = vld [vmem:[#allocation5 + $0xbc] sm:$0xf]
    %v520 = vld [vmem:[#allocation5 + $0xd8] sm:$0xf]
    %v521 = vld [vmem:[#allocation5 + $0xf4] sm:$0xf]
    %v522 = vld [vmem:[#allocation5 + $0x110] sm:$0xf]
    %v523 = vld [vmem:[#allocation5 + $0x12c] sm:$0xf]
    %v524 = vld [vmem:[#allocation5 + $0x148] sm:$0xf]
    %v525 = vld [vmem:[#allocation5 + $0x164] sm:$0xf]
    %v526 = vld [vmem:[#allocation5 + $0x180] sm:$0xf]
    %v527 = vld [vmem:[#allocation5 + $0x19c] sm:$0xf]
    %v528 = vld [vmem:[#allocation5 + $0x1b8] sm:$0xf]
    %v529 = vld [vmem:[%s2 + $0x5] sm:$0x1]
    %v530 = vpack.c.bf16 %v506, %v505
    %v531 = vpack.c.bf16 %v508, %v507
    %v532 = vpack.c.bf16 %v510, %v509
    %v533 = vpack.c.bf16 %v512, %v511
    %v535 = vlaneseq
    %v536 = vshrl.u32 %v535, 7
    %v537 = vsub.s32 0, %v536
    %v538 = vrot.slane %v529, %v537
    %v556 = vunpack.c.l.b16 %v513
    %v557 = vunpack.c.l.b16 %v514
    %v558 = vunpack.c.l.b16 %v515
    %v559 = vunpack.c.l.b16 %v516
    %v560 = vunpack.c.l.b16 %v517
    %v561 = vunpack.c.l.b16 %v518
    %v562 = vunpack.c.l.b16 %v519
    %v563 = vunpack.c.l.b16 %v520
    %v564 = vunpack.c.l.b16 %v521
    %v565 = vunpack.c.l.b16 %v522
    %v566 = vunpack.c.l.b16 %v523
    %v567 = vunpack.c.l.b16 %v524
    %v568 = vunpack.c.l.b16 %v525
    %v569 = vunpack.c.l.b16 %v526
    %v570 = vunpack.c.l.b16 %v527
    %v571 = vunpack.c.l.b16 %v528
    %v572 = vpack.c.b16 %v557, %v556
    %v573 = vpack.c.b16 %v559, %v558
    %v574 = vpack.c.b16 %v561, %v560
    %v575 = vpack.c.b16 %v563, %v562
    %v576 = vpack.c.b16 %v565, %v564
    %v577 = vpack.c.b16 %v567, %v566
    %v578 = vpack.c.b16 %v569, %v568
    %v579 = vpack.c.b16 %v571, %v570
    %588 = vmatprep.subr.bf16.mxu0 0
    %589 = vmatpush1.bf16.msra.mxu0 %v572
    %590 = vmatprep.subr.bf16.mxu0 0
    %591 = vmatpush1.bf16.msra.mxu0 %v573
    %592 = vmatprep.subr.bf16.mxu0 0
    %593 = vmatpush1.bf16.msra.mxu0 %v574
    %594 = vmatprep.subr.bf16.mxu0 0
    %595 = vmatpush1.bf16.msra.mxu0 %v575
    %596 = vmatprep.subr.bf16.mxu0 0
    %597 = vmatpush1.bf16.msra.mxu0 %v576
    %598 = vmatprep.subr.bf16.mxu0 0
    %599 = vmatpush1.bf16.msra.mxu0 %v577
    %600 = vmatprep.subr.bf16.mxu0 0
    %601 = vmatpush1.bf16.msra.mxu0 %v578
    %602 = vmatprep.subr.bf16.mxu0 0
    %603 = vmatpush1.bf16.msra.mxu0 %v579
    %604 = vmatprep.subr.bf16.mxu0 0
    %605 = vmatpush1.bf16.msra.mxu0 0
    %606 = vmatprep.subr.bf16.mxu0 0
    %607 = vmatpush1.bf16.msra.mxu0 0
    %608 = vmatprep.subr.bf16.mxu0 0
    %609 = vmatpush1.bf16.msra.mxu0 0
    %610 = vmatprep.subr.bf16.mxu0 0
    %611 = vmatpush1.bf16.msra.mxu0 0
    %612 = vmatprep.subr.bf16.mxu0 0
    %613 = vmatpush1.bf16.msra.mxu0 0
    %614 = vmatprep.subr.bf16.mxu0 0
    %615 = vmatpush1.bf16.msra.mxu0 0
    %616 = vmatprep.subr.bf16.mxu0 0
    %617 = vmatpush1.bf16.msra.mxu0 0
    %618 = vmatprep.subr.bf16.mxu0 0
    %619 = vmatpush1.bf16.msra.mxu0 0
    %620 = vmatprep.mubr.bf16.mxu0 0
    %621 = vmatmul.mubr.bf16.gmra.mrb[0].mxu0 %v530
    %v622 = vpop.f32.mrb[0].mxu0
    %v623 = vadd.f32 %v538, %v622
    %v624 = vpop.f32.mrb[0].mxu0
    %v625 = vpop.f32.mrb[0].mxu0
    %v626 = vadd.f32 %v538, %v625
    %v627 = vpop.f32.mrb[0].mxu0
    %628 = vmatprep.mubr.bf16.mxu0 0
    %629 = vmatmul.mubr.bf16.gmra.mrb[0].mxu0 %v531
    %v630 = vpop.f32.mrb[0].mxu0
    %v631 = vadd.f32 %v538, %v630
    %v632 = vpop.f32.mrb[0].mxu0
    %v633 = vpop.f32.mrb[0].mxu0
    %v634 = vadd.f32 %v538, %v633
    %v635 = vpop.f32.mrb[0].mxu0
    %636 = vmatprep.mubr.bf16.mxu0 0
    %637 = vmatmul.mubr.bf16.gmra.mrb[0].mxu0 %v532
    %v638 = vpop.f32.mrb[0].mxu0
    %v639 = vadd.f32 %v538, %v638
    %v640 = vpop.f32.mrb[0].mxu0
    %v641 = vpop.f32.mrb[0].mxu0
    %v642 = vadd.f32 %v538, %v641
    %v643 = vpop.f32.mrb[0].mxu0
    %644 = vmatprep.mubr.bf16.mxu0 0
    %645 = vmatmul.mubr.bf16.gmra.mrb[0].mxu0 %v533
    %v646 = vpop.f32.mrb[0].mxu0
    %v647 = vadd.f32 %v538, %v646
    %v648 = vpop.f32.mrb[0].mxu0
    %v649 = vpop.f32.mrb[0].mxu0
    %v650 = vadd.f32 %v538, %v649
    %v651 = vpop.f32.mrb[0].mxu0
    %652 = vdwg.mxu0
    %v653 = vmax.f32 %v623, 0.0
    %v654 = vmax.f32 %v626, 0.0
    %v655 = vmax.f32 %v631, 0.0
    %v656 = vmax.f32 %v634, 0.0
    %v657 = vmax.f32 %v639, 0.0
    %v658 = vmax.f32 %v642, 0.0
    %v659 = vmax.f32 %v647, 0.0
    %v660 = vmax.f32 %v650, 0.0
    %v661 = vld [vmem:[#allocation5 + $0x18] sm:$0xf]
    %v662 = vld [vmem:[#allocation5 + $0x34] sm:$0xf]
    %v663 = vld [vmem:[#allocation5 + $0x50] sm:$0xf]
    %v664 = vld [vmem:[#allocation5 + $0x6c] sm:$0xf]
    %v665 = vld [vmem:[#allocation5 + $0x88] sm:$0xf]
    %v666 = vld [vmem:[#allocation5 + $0xa4] sm:$0xf]
    %v667 = vld [vmem:[#allocation5 + $0xc0] sm:$0xf]
    %v668 = vld [vmem:[#allocation5 + $0xdc] sm:$0xf]
    %v669 = vld [vmem:[#allocation5 + $0xf8] sm:$0xf]
    %v670 = vld [vmem:[#allocation5 + $0x114] sm:$0xf]
    %v671 = vld [vmem:[#allocation5 + $0x130] sm:$0xf]
    %v672 = vld [vmem:[#allocation5 + $0x14c] sm:$0xf]
    %v673 = vld [vmem:[#allocation5 + $0x168] sm:$0xf]
    %v674 = vld [vmem:[#allocation5 + $0x184] sm:$0xf]
    %v675 = vld [vmem:[#allocation5 + $0x1a0] sm:$0xf]
    %v676 = vld [vmem:[#allocation5 + $0x1bc] sm:$0xf]
    %v677 = vld [vmem:[%s2 + $0x6] sm:$0x1]
    %v678 = vpack.c.bf16 %v654, %v653
    %v679 = vpack.c.bf16 %v656, %v655
    %v680 = vpack.c.bf16 %v658, %v657
    %v681 = vpack.c.bf16 %v660, %v659
    %v683 = vlaneseq
    %v684 = vshrl.u32 %v683, 7
    %v685 = vsub.s32 0, %v684
    %v686 = vrot.slane %v677, %v685
    %v704 = vunpack.c.l.b16 %v661
    %v705 = vunpack.c.l.b16 %v662
    %v706 = vunpack.c.l.b16 %v663
    %v707 = vunpack.c.l.b16 %v664
    %v708 = vunpack.c.l.b16 %v665
    %v709 = vunpack.c.l.b16 %v666
    %v710 = vunpack.c.l.b16 %v667
    %v711 = vunpack.c.l.b16 %v668
    %v712 = vunpack.c.l.b16 %v669
    %v713 = vunpack.c.l.b16 %v670
    %v714 = vunpack.c.l.b16 %v671
    %v715 = vunpack.c.l.b16 %v672
    %v716 = vunpack.c.l.b16 %v673
    %v717 = vunpack.c.l.b16 %v674
    %v718 = vunpack.c.l.b16 %v675
    %v719 = vunpack.c.l.b16 %v676
    %v720 = vpack.c.b16 %v705, %v704
    %v721 = vpack.c.b16 %v707, %v706
    %v722 = vpack.c.b16 %v709, %v708
    %v723 = vpack.c.b16 %v711, %v710
    %v724 = vpack.c.b16 %v713, %v712
    %v725 = vpack.c.b16 %v715, %v714
    %v726 = vpack.c.b16 %v717, %v716
    %v727 = vpack.c.b16 %v719, %v718
    %736 = vmatprep.subr.bf16.mxu0 0
    %737 = vmatpush1.bf16.msra.mxu0 %v720
    %738 = vmatprep.subr.bf16.mxu0 0
    %739 = vmatpush1.bf16.msra.mxu0 %v721
    %740 = vmatprep.subr.bf16.mxu0 0
    %741 = vmatpush1.bf16.msra.mxu0 %v722
    %742 = vmatprep.subr.bf16.mxu0 0
    %743 = vmatpush1.bf16.msra.mxu0 %v723
    %744 = vmatprep.subr.bf16.mxu0 0
    %745 = vmatpush1.bf16.msra.mxu0 %v724
    %746 = vmatprep.subr.bf16.mxu0 0
    %747 = vmatpush1.bf16.msra.mxu0 %v725
    %748 = vmatprep.subr.bf16.mxu0 0
    %749 = vmatpush1.bf16.msra.mxu0 %v726
    %750 = vmatprep.subr.bf16.mxu0 0
    %751 = vmatpush1.bf16.msra.mxu0 %v727
    %752 = vmatprep.subr.bf16.mxu0 0
    %753 = vmatpush1.bf16.msra.mxu0 0
    %754 = vmatprep.subr.bf16.mxu0 0
    %755 = vmatpush1.bf16.msra.mxu0 0
    %756 = vmatprep.subr.bf16.mxu0 0
    %757 = vmatpush1.bf16.msra.mxu0 0
    %758 = vmatprep.subr.bf16.mxu0 0
    %759 = vmatpush1.bf16.msra.mxu0 0
    %760 = vmatprep.subr.bf16.mxu0 0
    %761 = vmatpush1.bf16.msra.mxu0 0
    %762 = vmatprep.subr.bf16.mxu0 0
    %763 = vmatpush1.bf16.msra.mxu0 0
    %764 = vmatprep.subr.bf16.mxu0 0
    %765 = vmatpush1.bf16.msra.mxu0 0
    %766 = vmatprep.subr.bf16.mxu0 0
    %767 = vmatpush1.bf16.msra.mxu0 0
    %768 = vmatprep.mubr.bf16.mxu0 0
    %769 = vmatmul.mubr.bf16.gmra.mrb[0].mxu0 %v678
    %v770 = vpop.f32.mrb[0].mxu0
    %v771 = vadd.f32 %v686, %v770
    %v772 = vpop.f32.mrb[0].mxu0
    %v773 = vpop.f32.mrb[0].mxu0
    %v774 = vadd.f32 %v686, %v773
    %v775 = vpop.f32.mrb[0].mxu0
    %776 = vmatprep.mubr.bf16.mxu0 0
    %777 = vmatmul.mubr.bf16.gmra.mrb[0].mxu0 %v679
    %v778 = vpop.f32.mrb[0].mxu0
    %v779 = vadd.f32 %v686, %v778
    %v780 = vpop.f32.mrb[0].mxu0
    %v781 = vpop.f32.mrb[0].mxu0
    %v782 = vadd.f32 %v686, %v781
    %v783 = vpop.f32.mrb[0].mxu0
    %784 = vmatprep.mubr.bf16.mxu0 0
    %785 = vmatmul.mubr.bf16.gmra.mrb[0].mxu0 %v680
    %v786 = vpop.f32.mrb[0].mxu0
    %v787 = vadd.f32 %v686, %v786
    %v788 = vpop.f32.mrb[0].mxu0
    %v789 = vpop.f32.mrb[0].mxu0
    %v790 = vadd.f32 %v686, %v789
    %v791 = vpop.f32.mrb[0].mxu0
    %792 = vmatprep.mubr.bf16.mxu0 0
    %793 = vmatmul.mubr.bf16.gmra.mrb[0].mxu0 %v681
    %v794 = vpop.f32.mrb[0].mxu0
    %v795 = vadd.f32 %v686, %v794
    %v796 = vpop.f32.mrb[0].mxu0
    %v797 = vpop.f32.mrb[0].mxu0
    %v798 = vadd.f32 %v686, %v797
    %v799 = vpop.f32.mrb[0].mxu0
    %800 = vdwg.mxu0
    %v801 = vmax.f32 %v771, 0.0
    %v802 = vmax.f32 %v774, 0.0
    %v803 = vmax.f32 %v779, 0.0
    %v804 = vmax.f32 %v782, 0.0
    %v805 = vmax.f32 %v787, 0.0
    %v806 = vmax.f32 %v790, 0.0
    %v807 = vmax.f32 %v795, 0.0
    %v808 = vmax.f32 %v798, 0.0
    %809 = vst [vmem:[#allocation7] sm:$0xff] %v801
    %810 = vst [vmem:[#allocation7 + $0x20] sm:$0xff] %v802
    %811 = vst [vmem:[#allocation7 + $0x8] sm:$0xff] %v803
    %812 = vst [vmem:[#allocation7 + $0x28] sm:$0xff] %v804
    %813 = vst [vmem:[#allocation7 + $0x10] sm:$0xff] %v805
    %814 = vst [vmem:[#allocation7 + $0x30] sm:$0xff] %v806
    %815 = vst [vmem:[#allocation7 + $0x18] sm:$0xff] %v807
    %816 = vst [vmem:[#allocation7 + $0x38] sm:$0xff] %v808
    // Predicated region
    $region22: #{tpu_custom_call.1} parent=1 // pred_check
      _
    $region23: #{tpu_custom_call.1} parent=1 // pred_check_branch
      %818 = sbr.rel (0) target = $region25
    $region24: #{tpu_custom_call.1} parent=1 // pred_region
      %s820 = ssub.s32 1024, 1024
      %821 = vsyncadd [#allocation4], %s820
      %s822 = sshll.u32 [#allocation7], 4
      %s823 = int_to_ptr.vmem [resolvable:$true] %s822
      %828 = dma.vmem_to_hbm [thread:$0]  %s823, 1024, %s3, [#allocation4], 512, 512, 32
    $region25: #{tpu_custom_call.1} parent=1 // pred_fallthru
      _
    // Predicated region
    $region26: #{tpu_custom_call.1} parent=1 // pred_check
      _
    $region27: #{tpu_custom_call.1} parent=1 // pred_check_branch
      %830 = sbr.rel (0) target = $region29
    $region28: #{tpu_custom_call.1} parent=1 // pred_region
      %831 = dma.done [#allocation4], 1024
    $region29: #{tpu_custom_call.1} parent=1 // pred_fallthru
      _
    %832 = vsyncpa [#allocation3], 1
    %833 = vsyncpa [#allocation6], 1
    %834 = vsyncpa [#allocation4], 1

</llo_original>
